<compile_context>
chip_gen: v6e
topology: v6e:2x2x1
jax: 0.10.0
libtpu: 0.0.40
codegen_flags: <defaults>
</compile_context>

<pallas_src>
import math
import warnings

import numpy as np

import jax
import jax.numpy as jnp
from jax.experimental import pallas as pl
from jax.experimental.pallas import tpu as pltpu

_TILE_BYTES_TARGET = 4 * 1024 * 1024   # ~4 MiB per block (in+out x 2 buffers = 16 MiB)
_VMEM_LIMIT_BYTES = 48 * 1024 * 1024   # < 64 MiB physical on v7x; ample on v5e/v6e
_MIN_GRID_STEPS = 4                    # >= 2 steps per TensorCore on v7x megacore
_LANE_CANDIDATES = (1024, 512, 256, 128)


def _copy_kernel(x_ref, o_ref):
    # Elementwise pass-through on the current VMEM tile.
    o_ref[...] = x_ref[...]


def _sublane_pack(dtype):
    # 8 rows for 4-byte dtypes, 16 for 2-byte, 32 for 1-byte.
    # TODO(synk): sub-byte dtypes (int4/fp4) need 64-row packing; not handled.
    return max(8, 32 // jnp.dtype(dtype).itemsize)


def _lane_width(total):
    """Largest multiple-of-128 lane width that divides `total` (zero-copy reshape)."""
    for lanes in _LANE_CANDIDATES:
        if total % lanes == 0:
            return lanes
    return None


def _row_tile(rows, lanes, itemsize, pack):
    """Rows per block: ~_TILE_BYTES_TARGET bytes, multiple of the sublane pack,
    capped so large inputs keep at least _MIN_GRID_STEPS grid steps."""
    if rows <= _MIN_GRID_STEPS * pack:
        # Tiny slab: one block spanning the full row extent (a block dim equal
        # to the full array dim is always a legal block shape).
        return rows
    tr = max(pack, (_TILE_BYTES_TARGET // (lanes * itemsize)) // pack * pack)
    cap = max(pack, (pl.cdiv(rows, _MIN_GRID_STEPS) // pack) * pack)
    return min(tr, cap)


def _tiled_identity(x2d, tr, lanes, bytes_accessed):
    rows = x2d.shape[0]
    return pl.pallas_call(
        _copy_kernel,
        out_shape=jax.ShapeDtypeStruct(x2d.shape, x2d.dtype),
        grid_spec=pl.GridSpec(
            grid=(pl.cdiv(rows, tr),),
            in_specs=[pl.BlockSpec((tr, lanes), lambda i: (i, 0))],
            out_specs=pl.BlockSpec((tr, lanes), lambda i: (i, 0)),
        ),
        # Pure identity: let the output reuse the input HBM buffer (effective
        # when the caller donates x; otherwise XLA inserts a protective copy).
        input_output_aliases={0: 0},
        compiler_params=pltpu.CompilerParams(
            dimension_semantics=("parallel",),
            vmem_limit_bytes=_VMEM_LIMIT_BYTES,
        ),
        cost_estimate=pl.CostEstimate(
            flops=0, transcendentals=0, bytes_accessed=bytes_accessed
        ),
    )(x2d)


def _ragged_identity(x, total):
    """Fallback for element counts not divisible by 128 (pad + slice).

    TODO(synk): replace with an in-kernel flat HBM->HBM DMA over pl.ds chunks
    (memory_space=pl.ANY) to avoid the wrapper-side pad/slice copies.  Only
    hit when total % 128 != 0, which real NN tensors essentially never are.
    """
    dtype = x.dtype
    itemsize = jnp.dtype(dtype).itemsize
    lanes = 128
    pack = _sublane_pack(dtype)
    rows = pl.cdiv(total, lanes)
    tr = _row_tile(rows, lanes, itemsize, pack)

    flat = x.reshape(-1)
    padded_total = rows * lanes
    if padded_total != total:
        flat = jnp.pad(flat, (0, padded_total - total))
    x2d = flat.reshape(rows, lanes)

    out2d = _tiled_identity(x2d, tr, lanes, 2 * total * itemsize)
    return out2d.reshape(-1)[:total].reshape(x.shape)


def template_forward(x):
    """Pallas equivalent of TEMPLATE.forward: logits = x_in (identity stub)."""
    orig_shape = x.shape
    dtype = x.dtype
    total = math.prod(orig_shape)
    if total == 0:
        return x

    itemsize = jnp.dtype(dtype).itemsize
    lanes = _lane_width(total)
    if lanes is None:
        return _ragged_identity(x, total)

    pack = _sublane_pack(dtype)
    rows = total // lanes
    tr = _row_tile(rows, lanes, itemsize, pack)

    # Zero-copy (bitcast) reshape to a lane-dense 2-D slab: unmasked vst
    # stores and no wrapper-side HBM pad/slice traffic.
    x2d = x.reshape(rows, lanes)
    out2d = _tiled_identity(x2d, tr, lanes, 2 * total * itemsize)
    return out2d.reshape(orig_shape)


if __name__ == "__main__":
    key = jax.random.PRNGKey(0)

    # Primary input: small NCHW tensor consistent with a conv-style template.
    x = jax.random.normal(key, (2, 4, 16, 16), dtype=jnp.float32)
    x_host = np.asarray(x)  # snapshot for validation: x is donated below

    # Donate x so the input/output alias is honored with zero extra HBM
    # allocation.  (Any "donated buffer not usable" warning is benign.)
    fwd_donating = jax.jit(template_forward, donate_argnums=0)
    with warnings.catch_warnings():
        warnings.simplefilter("ignore")
        logits = fwd_donating(x)
    jax.block_until_ready(logits)

    assert logits.shape == x_host.shape
    assert logits.dtype == x_host.dtype
    assert np.array_equal(np.asarray(logits), x_host)

    # lanes=128 path: 3200 elements (multiple of 128 but not of 512) —
    # exercises the adaptive lane width with no wrapper-side padding.
    x2 = jax.random.normal(jax.random.PRNGKey(1), (1, 25, 8, 16), dtype=jnp.float32)
    y2 = template_forward(x2)
    jax.block_until_ready(y2)
    assert y2.shape == x2.shape and y2.dtype == x2.dtype
    assert bool(jnp.all(y2 == x2))

    # Multi-step grid path (bf16, 1 MiB): 4 grid steps, 16-row sublane pack.
    x3 = jax.random.normal(jax.random.PRNGKey(2), (4, 16, 64, 128), dtype=jnp.bfloat16)
    y3 = template_forward(x3)
    jax.block_until_ready(y3)
    assert y3.shape == x3.shape and y3.dtype == x3.dtype
    assert bool(jnp.all(y3 == x3))

    # Ragged fallback (total % 128 != 0): pad + slice path.
    x4 = jax.random.normal(jax.random.PRNGKey(3), (3, 5, 7), dtype=jnp.float32)
    y4 = template_forward(x4)
    jax.block_until_ready(y4)
    assert y4.shape == x4.shape and y4.dtype == x4.dtype
    assert bool(jnp.all(y4 == x4))

    print("KERNEL_OK")
</pallas_src>

<mosaic_0001>
module attributes {stable_mosaic.version = 11 : i64} {
  func.func @_copy_kernel(%arg0: i32, %arg1: memref<2x1024xf32, #tpu.memory_space<vmem>>, %arg2: memref<2x1024xf32, #tpu.memory_space<vmem>>) attributes {dimension_semantics = [#tpu.dimension_semantics<parallel>], iteration_bounds = array<i64: 1>, scalar_prefetch = 0 : i64, scratch_operands = 0 : i64, tpu.core_type = #tpu.core_type<tc>, window_params = [{transform_indices = @transform_0, window_bounds = array<i64: 2, 1024>}, {transform_indices = @transform_1, window_bounds = array<i64: 2, 1024>}]} {
    %c0 = arith.constant 0 : index
    %c0_0 = arith.constant 0 : index
    %0 = vector.load %arg1[%c0, %c0_0] : memref<2x1024xf32, #tpu.memory_space<vmem>>, vector<2x1024xf32>
    %c0_1 = arith.constant 0 : index
    %c0_2 = arith.constant 0 : index
    %1 = vector.load %arg2[%c0_1, %c0_2] : memref<2x1024xf32, #tpu.memory_space<vmem>>, vector<2x1024xf32>
    tpu.vector_store %arg2[%c0_1, %c0_2], %0 {strides = array<i32>} : memref<2x1024xf32, #tpu.memory_space<vmem>>, vector<2x1024xf32>,
    return
  }
  func.func @transform_0(%arg0: i32) -> (i32, i32) {
    %c0_i32 = arith.constant 0 : i32
    %c0_i32_0 = arith.constant 0 : i32
    return %arg0, %c0_i32 : i32, i32
  }
  func.func @transform_1(%arg0: i32) -> (i32, i32) {
    %c0_i32 = arith.constant 0 : i32
    %c0_i32_0 = arith.constant 0 : i32
    return %arg0, %c0_i32 : i32, i32
  }
}

</mosaic_0001>

<llo_original>
// kernel: template_forward.1
$region0: #{template_forward.1}
  #allocation0 [shape = 'u32[]', space=smem, size = 0x4, offset = 0x4, fixed_abs, tag = 'smem constant byte address 0x4 - core index']
  #allocation1 [shape = 'u32[144,128]{1,0:T(1,128)}', space=vmem, size = 0x12000, scoped, tag = 'internal scratch']
  %s0 = inlined_call_operand.vmem [shape: f32[2,1024], index: 0, kind: input, shape index: {}, may-alias: {0,1}]
  %s1 = inlined_call_operand.vmem [shape: f32[2,1024], index: 1, kind: output, shape index: {}, may-alias: {0,1}]
  %s2 = sld [smem:[#allocation0]]
  $region14: #{template_forward.1} parent=0
    _
  %s4 = ssub.s32 1, %s2
  %s5 = scalar_select 0, %s4, %s2
  // Predicated region
  $region2: #{template_forward.1} parent=0 // pred_check
    _
  $region3: #{template_forward.1} parent=0 // pred_check_branch
    %7 = sbr.rel (0) target = $region5
  $region4: #{template_forward.1} parent=0 // pred_region
    _
  $region5: #{template_forward.1} parent=0 // pred_fallthru
    _
  %v8 = vld [vmem:[%s0] sm:$0xff]
  %v9 = vld [vmem:[%s0 + $0x8] sm:$0xff]
  %10 = vst [vmem:[%s1] sm:$0xff] %v8
  %11 = vst [vmem:[%s1 + $0x8] sm:$0xff] %v9
  // Predicated region
  $region6: #{template_forward.1} parent=0 // pred_check
    _
  $region7: #{template_forward.1} parent=0 // pred_check_branch
    %13 = sbr.rel (0) target = $region9
  $region8: #{template_forward.1} parent=0 // pred_region
    _
  $region9: #{template_forward.1} parent=0 // pred_fallthru
    _
  // Predicated region
  $region10: #{template_forward.1} parent=0 // pred_check
    _
  $region11: #{template_forward.1} parent=0 // pred_check_branch
    %15 = sbr.rel (0) target = $region13
  $region12: #{template_forward.1} parent=0 // pred_region
    _
  $region13: #{template_forward.1} parent=0 // pred_fallthru
    _

</llo_original>
